<compile_context>
chip_gen: v7x
topology: tpu7x:2x2x1
jax: 0.10.0
libtpu: 0.0.40
codegen_flags: <defaults>
</compile_context>

<pallas_src>
import jax
import jax.numpy as jnp
from jax.experimental import pallas as pl
from jax.experimental.pallas import tpu as pltpu


def _round_up(a, m):
    return (a + m - 1) // m * m


def _cdiv(a, b):
    return (a + b - 1) // b


def _balanced_tile(n, target, align):
    """Split n into equal-ish tiles: (tile, n_tiles, padded_n)."""
    n = max(int(n), 1)
    n_tiles = _cdiv(n, target)
    tile = _round_up(_cdiv(n, n_tiles), align)
    return tile, n_tiles, tile * n_tiles


def _hw_budget():
    """(ft_target, vmem_cap_bytes) chosen from the chip's physical VMEM."""
    try:
        vmem = int(pltpu.get_tpu_info().vmem_capacity_bytes)
    except Exception:  # unknown / query unavailable -> assume tight v7x budget
        vmem = 64 << 20
    if vmem >= (100 << 20):          # v5e / v6e: 128 MiB per TensorCore
        return 1024, 64 << 20
    return 512, 32 << 20             # v7x: 64 MiB per TensorCore


def _clf_kernel(x_ref, v_ref, sb_ref, o_ref):
    # Grid = (B tiles, C tiles, F tiles); F (axis 2) is the reduction axis and the
    # output block's index_map is constant over it, so o_ref stays VMEM-resident.
    k = pl.program_id(2)

    @pl.when(k == 0)
    def _init():
        o_ref[...] = jnp.zeros_like(o_ref)

    # Partial x @ v^T, contracting on F directly; bf16 MXU, f32 accumulation,
    # accumulated straight into the output block (no extra scratch / copy).
    o_ref[...] += jax.lax.dot_general(
        x_ref[...], v_ref[...],
        dimension_numbers=(((1,), (1,)), ((), ())),
        preferred_element_type=jnp.float32)

    @pl.when(k == pl.num_programs(2) - 1)
    def _finalize():
        sb = sb_ref[...]                      # (2, TC): row 0 = g/||v||, row 1 = bias
        o_ref[...] = o_ref[...] * sb[0:1, :] + sb[1:2, :]


def make_classifier(v, g, b):
    """Precondition the weight-normalized Linear once; return forward(x)->logits.

    v: (C, F) weight_v, g: (C,) weight_g, b: (C,) bias.  forward(x): (B, F) -> (B, C) f32.
    """
    C, F = v.shape
    ft_target, vmem_cap = _hw_budget()

    # Static (weight-side) tiling: lane-dense class dim, balanced F tiles.
    C_pad = _round_up(C, 128)
    if C_pad <= 256:
        TC, n_c = C_pad, 1
    else:
        TC, n_c, C_pad = _balanced_tile(C_pad, 256, 128)
    FT, n_k, F_pad = _balanced_tile(F, ft_target, 128)

    # One-time weight preconditioning (hoisted out of the per-call path).
    # The weight-norm scale is computed from the *f32* v (matches torch), only the
    # matmul operand is quantized to bf16. Padded class columns get scale=bias=0.
    v32 = v.astype(jnp.float32)
    scale = g.astype(jnp.float32) * jax.lax.rsqrt(jnp.sum(v32 * v32, axis=1))
    vb = jnp.zeros((C_pad, F_pad), jnp.bfloat16).at[:C, :F].set(
        v.astype(jnp.bfloat16))
    sb = (jnp.zeros((2, C_pad), jnp.float32)
          .at[0, :C].set(scale)
          .at[1, :C].set(b.astype(jnp.float32)))

    @jax.jit
    def _forward(x, vb, sb):
        B = x.shape[0]
        TB, n_b, B_pad = _balanced_tile(B, 256, 16)   # 16: bf16 sublane packing
        xb = jnp.zeros((B_pad, F_pad), jnp.bfloat16).at[:B, :F].set(
            x.astype(jnp.bfloat16))

        # VMEM actually used by the pipeline (double-buffered tiles), with headroom.
        tile_bytes = (2 * TB * FT * 2            # x tiles (2 buffers, bf16)
                      + 2 * TC * FT * 2          # v tiles (2 buffers, bf16)
                      + 2 * 2 * TC * 4           # packed scale/bias
                      + 2 * TB * TC * 4)         # f32 output block
        vmem_limit = int(min(max(2 * tile_bytes, 1 << 20), vmem_cap))

        cost = pl.CostEstimate(
            flops=2 * B_pad * C_pad * F_pad,
            bytes_accessed=(n_c * B_pad * F_pad * 2 + n_b * C_pad * F_pad * 2
                            + B_pad * C_pad * 4 + n_b * 2 * C_pad * 4),
            transcendentals=0,
        )

        out = pl.pallas_call(
            _clf_kernel,
            out_shape=jax.ShapeDtypeStruct((B_pad, C_pad), jnp.float32),
            grid_spec=pltpu.PrefetchScalarGridSpec(
                num_scalar_prefetch=0,
                grid=(n_b, n_c, n_k),
                in_specs=[
                    pl.BlockSpec((TB, FT), lambda i, j, k: (i, k)),   # x
                    pl.BlockSpec((TC, FT), lambda i, j, k: (j, k)),   # v (bf16)
                    pl.BlockSpec((2, TC), lambda i, j, k: (0, j)),    # scale/bias
                ],
                out_specs=pl.BlockSpec((TB, TC), lambda i, j, k: (i, j)),
            ),
            compiler_params=pltpu.CompilerParams(
                dimension_semantics=("parallel", "parallel", "arbitrary"),
                vmem_limit_bytes=vmem_limit,
            ),
            cost_estimate=cost,
        )(xb, vb, sb)
        return out[:B, :C]

    def forward(x):
        return _forward(x, vb, sb)

    return forward


if __name__ == "__main__":
    # Small shapes standing in for constants.original_masked_nnz (F) and
    # len(args.meta['c2i']) (C).
    B = 8      # batch
    F = 512    # in_features (masked nnz)
    C = 16     # number of classes

    key = jax.random.PRNGKey(0)
    kx, kv, kg, kb = jax.random.split(key, 4)
    x = jax.random.normal(kx, (B, F), dtype=jnp.float32)
    v = jax.random.normal(kv, (C, F), dtype=jnp.float32) * 0.05      # weight_v
    g = jax.random.normal(kg, (C,), dtype=jnp.float32) * 0.1 + 1.0   # weight_g
    b = jax.random.normal(kb, (C,), dtype=jnp.float32) * 0.01        # bias

    forward = make_classifier(v, g, b)
    out = jax.block_until_ready(forward(x))

    # Reference in plain f32 JAX (same math as torch weight_norm Linear).
    w_eff = v * (g[:, None] * jax.lax.rsqrt(jnp.sum(v * v, axis=1, keepdims=True)))
    ref = x @ w_eff.T + b[None, :]
    assert out.shape == (B, C)
    # bf16 matmul operand -> modest tolerance on O(1) logits.
    assert jnp.allclose(out, ref, atol=3e-2, rtol=3e-2), float(
        jnp.max(jnp.abs(out - ref)))

    print("KERNEL_OK")
</pallas_src>

<mosaic_0001>
module attributes {stable_mosaic.version = 11 : i64} {
  func.func @_clf_kernel(%arg0: i32, %arg1: i32, %arg2: i32, %arg3: memref<16x512xbf16, #tpu.memory_space<vmem>>, %arg4: memref<128x512xbf16, #tpu.memory_space<vmem>>, %arg5: memref<2x128xf32, #tpu.memory_space<vmem>>, %arg6: memref<16x128xf32, #tpu.memory_space<vmem>>) attributes {dimension_semantics = [#tpu.dimension_semantics<parallel>, #tpu.dimension_semantics<parallel>, #tpu.dimension_semantics<arbitrary>], iteration_bounds = array<i64: 1, 1, 1>, scalar_prefetch = 0 : i64, scratch_operands = 0 : i64, tpu.core_type = #tpu.core_type<tc>, window_params = [{transform_indices = @transform_0, window_bounds = array<i64: 16, 512>}, {transform_indices = @transform_1, window_bounds = array<i64: 128, 512>}, {transform_indices = @transform_2, window_bounds = array<i64: 2, 128>}, {transform_indices = @transform_3, window_bounds = array<i64: 16, 128>}]} {
    %c0_i32 = arith.constant 0 : i32
    %0 = arith.cmpi eq, %arg2, %c0_i32 : i32
    %1 = arith.extui %0 : i1 to i32
    %c0_i32_0 = arith.constant 0 : i32
    %2 = arith.cmpi ne, %1, %c0_i32_0 : i32
    scf.if %2 {
      %cst_10 = arith.constant 0.000000e+00 : f32
      %12 = vector.broadcast %cst_10 : f32 to vector<16x128xf32>
      %c0_11 = arith.constant 0 : index
      %c0_12 = arith.constant 0 : index
      %13 = vector.load %arg6[%c0_11, %c0_12] : memref<16x128xf32, #tpu.memory_space<vmem>>, vector<16x128xf32>
      tpu.vector_store %arg6[%c0_11, %c0_12], %12 {strides = array<i32>} : memref<16x128xf32, #tpu.memory_space<vmem>>, vector<16x128xf32>,
    } else {
    }
    %c0 = arith.constant 0 : index
    %c0_1 = arith.constant 0 : index
    %3 = vector.load %arg6[%c0, %c0_1] : memref<16x128xf32, #tpu.memory_space<vmem>>, vector<16x128xf32>
    %c0_2 = arith.constant 0 : index
    %c0_3 = arith.constant 0 : index
    %4 = vector.load %arg3[%c0_2, %c0_3] : memref<16x512xbf16, #tpu.memory_space<vmem>>, vector<16x512xbf16>
    %c0_4 = arith.constant 0 : index
    %c0_5 = arith.constant 0 : index
    %5 = vector.load %arg4[%c0_4, %c0_5] : memref<128x512xbf16, #tpu.memory_space<vmem>>, vector<128x512xbf16>
    %cst = arith.constant dense<0.000000e+00> : vector<16x128xf32>
    %6 = tpu.matmul %4, %5, %cst {dimension_numbers = #tpu.dot_dimension_numbers<[1], [1], [0], [0], [0, 0, 1, 0], [], []>} : vector<16x512xbf16>, vector<128x512xbf16>, vector<16x128xf32> -> vector<16x128xf32>
    %7 = arith.addf %3, %6 : vector<16x128xf32>
    %c0_6 = arith.constant 0 : index
    %c0_7 = arith.constant 0 : index
    %8 = vector.load %arg6[%c0_6, %c0_7] : memref<16x128xf32, #tpu.memory_space<vmem>>, vector<16x128xf32>
    tpu.vector_store %arg6[%c0_6, %c0_7], %7 {strides = array<i32>} : memref<16x128xf32, #tpu.memory_space<vmem>>, vector<16x128xf32>,
    %c0_i32_8 = arith.constant 0 : i32
    %9 = arith.cmpi eq, %arg2, %c0_i32_8 : i32
    %10 = arith.extui %9 : i1 to i32
    %c0_i32_9 = arith.constant 0 : i32
    %11 = arith.cmpi ne, %10, %c0_i32_9 : i32
    scf.if %11 {
      %c0_10 = arith.constant 0 : index
      %c0_11 = arith.constant 0 : index
      %12 = vector.load %arg5[%c0_10, %c0_11] : memref<2x128xf32, #tpu.memory_space<vmem>>, vector<2x128xf32>
      %c0_12 = arith.constant 0 : index
      %c0_13 = arith.constant 0 : index
      %13 = vector.load %arg6[%c0_12, %c0_13] : memref<16x128xf32, #tpu.memory_space<vmem>>, vector<16x128xf32>
      %14 = vector.extract_strided_slice %12 {offsets = [0, 0], sizes = [1, 128], strides = [1, 1]} : vector<2x128xf32> to vector<1x128xf32>
      %15 = vector.broadcast %14 : vector<1x128xf32> to vector<16x128xf32>
      %16 = arith.mulf %13, %15 : vector<16x128xf32>
      %17 = vector.extract_strided_slice %12 {offsets = [1, 0], sizes = [1, 128], strides = [1, 1]} : vector<2x128xf32> to vector<1x128xf32>
      %18 = vector.broadcast %17 : vector<1x128xf32> to vector<16x128xf32>
      %19 = arith.addf %16, %18 : vector<16x128xf32>
      %c0_14 = arith.constant 0 : index
      %c0_15 = arith.constant 0 : index
      %20 = vector.load %arg6[%c0_14, %c0_15] : memref<16x128xf32, #tpu.memory_space<vmem>>, vector<16x128xf32>
      tpu.vector_store %arg6[%c0_14, %c0_15], %19 {strides = array<i32>} : memref<16x128xf32, #tpu.memory_space<vmem>>, vector<16x128xf32>,
    } else {
    }
    return
  }
  func.func @transform_0(%arg0: i32, %arg1: i32, %arg2: i32) -> (i32, i32) {
    %c0_i32 = arith.constant 0 : i32
    return %arg0, %arg2 : i32, i32
  }
  func.func @transform_1(%arg0: i32, %arg1: i32, %arg2: i32) -> (i32, i32) {
    %c0_i32 = arith.constant 0 : i32
    return %arg1, %arg2 : i32, i32
  }
  func.func @transform_2(%arg0: i32, %arg1: i32, %arg2: i32) -> (i32, i32) {
    %c0_i32 = arith.constant 0 : i32
    %c0_i32_0 = arith.constant 0 : i32
    return %c0_i32, %arg1 : i32, i32
  }
  func.func @transform_3(%arg0: i32, %arg1: i32, %arg2: i32) -> (i32, i32) {
    %c0_i32 = arith.constant 0 : i32
    return %arg0, %arg1 : i32, i32
  }
}

</mosaic_0001>

<llo_original>
// kernel: _forward.1
$region0: #{_forward.1}
  #allocation0 [shape = 'u32[]', space=smem, size = 0x4, offset = 0x4, fixed_abs, tag = 'smem constant byte address 0x4 - core index']
  #allocation1 [shape = 'u32[144,128]{1,0:T(1,128)}', space=vmem, size = 0x12000, scoped, tag = 'internal scratch']
  %s0 = inlined_call_operand.vmem [shape: bf16[16,512], index: 0, kind: input, shape index: {}]
  %s1 = inlined_call_operand.hbm [shape: bf16[128,512], index: 1, kind: input, shape index: {}]
  %s2 = inlined_call_operand.vmem [shape: f32[2,128], index: 2, kind: input, shape index: {}]
  %s3 = inlined_call_operand.vmem [shape: f32[16,128], index: 3, kind: output, shape index: {}]
  %s4 = sld [smem:[#allocation0]]
  $region34: #{_forward.1} parent=0
    _
  %s6 = ssub.s32 1, %s4
  %s7 = scalar_select 0, %s6, %s4
  $region1: #{_forward.1} parent=0
    #allocation2 [shape = 'u8[131072]{0}', space=vmem, size = 0x20000, scoped, tag = 'input window, operand 1, single buffered']
    #allocation3 [shape = 's32[1]{0}', space=sflag, size = 0x4, scoped, tag = 'scoped memory for _forward.1']
    %8 = vsyncpa [#allocation3], 0
    // Predicated region
    $region2: #{_forward.1} parent=1 // pred_check
      _
    $region3: #{_forward.1} parent=1 // pred_check_branch
      %10 = sbr.rel (0) target = $region5
    $region4: #{_forward.1} parent=1 // pred_region
      _
    $region5: #{_forward.1} parent=1 // pred_fallthru
      _
    // Predicated region
    $region6: #{_forward.1} parent=1 // pred_check
      _
    $region7: #{_forward.1} parent=1 // pred_check_branch
      %12 = sbr.rel (0) target = $region9
    $region8: #{_forward.1} parent=1 // pred_region
      %s14 = ssub.s32 4096, 4096
      %15 = vsyncadd [#allocation3], %s14
      %s16 = sshll.u32 [#allocation2], 4
      %s17 = int_to_ptr.vmem [resolvable:$true] %s16
      %22 = dma.hbm_to_vmem [thread:$0]  %s1, 4096, %s17, [#allocation3], 256, 256, 16
    $region9: #{_forward.1} parent=1 // pred_fallthru
      _
    // Predicated region
    $region10: #{_forward.1} parent=1 // pred_check
      _
    $region11: #{_forward.1} parent=1 // pred_check_branch
      %24 = sbr.rel (0) target = $region13
    $region12: #{_forward.1} parent=1 // pred_region
      _
    $region13: #{_forward.1} parent=1 // pred_fallthru
      _
    // Predicated region
    $region14: #{_forward.1} parent=1 // pred_check
      _
    $region15: #{_forward.1} parent=1 // pred_check_branch
      %26 = sbr.rel (0) target = $region17
    $region16: #{_forward.1} parent=1 // pred_region
      %27 = dma.done [#allocation3], 4096
    $region17: #{_forward.1} parent=1 // pred_fallthru
      _
    %p29 = scmp.eq.s32.totalorder 0, 0
    // Predicated region
    $region18: #{_forward.1} parent=1 // pred_check
      %p30 = pneg %p29
    $region19: #{_forward.1} parent=1 // pred_check_branch
      %32 = sbr.rel (%p30) target = $region21
    $region20: #{_forward.1} parent=1 // pred_region
      %33 = vst [vmem:[%s3] sm:$0xff] 0.0
      %34 = vst [vmem:[%s3 + $0x8] sm:$0xff] 0.0
    $region21: #{_forward.1} parent=1 // pred_fallthru
      _
    %v35 = vld [vmem:[%s3] sm:$0xff]
    %v36 = vld [vmem:[%s3 + $0x8] sm:$0xff]
    %v37 = vld [vmem:[%s0] sm:$0xff]
    %v38 = vld [vmem:[%s0 + $0x8] sm:$0xff]
    %v39 = vld [vmem:[%s0 + $0x10] sm:$0xff]
    %v40 = vld [vmem:[%s0 + $0x18] sm:$0xff]
    %v41 = vld [vmem:[#allocation2] sm:$0xff]
    %v42 = vld [vmem:[#allocation2 + $0x8] sm:$0xff]
    %v43 = vld [vmem:[#allocation2 + $0x10] sm:$0xff]
    %v44 = vld [vmem:[#allocation2 + $0x18] sm:$0xff]
    %v45 = vld [vmem:[#allocation2 + $0x20] sm:$0xff]
    %v46 = vld [vmem:[#allocation2 + $0x28] sm:$0xff]
    %v47 = vld [vmem:[#allocation2 + $0x30] sm:$0xff]
    %v48 = vld [vmem:[#allocation2 + $0x38] sm:$0xff]
    %v49 = vld [vmem:[#allocation2 + $0x40] sm:$0xff]
    %v50 = vld [vmem:[#allocation2 + $0x48] sm:$0xff]
    %v51 = vld [vmem:[#allocation2 + $0x50] sm:$0xff]
    %v52 = vld [vmem:[#allocation2 + $0x58] sm:$0xff]
    %v53 = vld [vmem:[#allocation2 + $0x60] sm:$0xff]
    %v54 = vld [vmem:[#allocation2 + $0x68] sm:$0xff]
    %v55 = vld [vmem:[#allocation2 + $0x70] sm:$0xff]
    %v56 = vld [vmem:[#allocation2 + $0x78] sm:$0xff]
    %v57 = vld [vmem:[#allocation2 + $0x80] sm:$0xff]
    %v58 = vld [vmem:[#allocation2 + $0x88] sm:$0xff]
    %v59 = vld [vmem:[#allocation2 + $0x90] sm:$0xff]
    %v60 = vld [vmem:[#allocation2 + $0x98] sm:$0xff]
    %v61 = vld [vmem:[#allocation2 + $0xa0] sm:$0xff]
    %v62 = vld [vmem:[#allocation2 + $0xa8] sm:$0xff]
    %v63 = vld [vmem:[#allocation2 + $0xb0] sm:$0xff]
    %v64 = vld [vmem:[#allocation2 + $0xb8] sm:$0xff]
    %v65 = vld [vmem:[#allocation2 + $0xc0] sm:$0xff]
    %v66 = vld [vmem:[#allocation2 + $0xc8] sm:$0xff]
    %v67 = vld [vmem:[#allocation2 + $0xd0] sm:$0xff]
    %v68 = vld [vmem:[#allocation2 + $0xd8] sm:$0xff]
    %v69 = vld [vmem:[#allocation2 + $0xe0] sm:$0xff]
    %v70 = vld [vmem:[#allocation2 + $0xe8] sm:$0xff]
    %v71 = vld [vmem:[#allocation2 + $0xf0] sm:$0xff]
    %v72 = vld [vmem:[#allocation2 + $0xf8] sm:$0xff]
    %v77 = vunpack.c.l.b16 %v37
    %v78 = vunpack.c.h.b16 %v37
    %v79 = vunpack.c.l.b16 %v38
    %v80 = vunpack.c.h.b16 %v38
    %v81 = vunpack.c.l.b16 %v39
    %v82 = vunpack.c.h.b16 %v39
    %v83 = vunpack.c.l.b16 %v40
    %v84 = vunpack.c.h.b16 %v40
    %v85 = vpack.c.b16 %v81, %v77
    %v86 = vpack.c.b16 %v82, %v78
    %v87 = vpack.c.b16 %v83, %v79
    %v88 = vpack.c.b16 %v84, %v80
    %v125 = vunpack.c.l.b16 %v41
    %v126 = vunpack.c.h.b16 %v41
    %v127 = vunpack.c.l.b16 %v42
    %v128 = vunpack.c.h.b16 %v42
    %v129 = vunpack.c.l.b16 %v43
    %v130 = vunpack.c.h.b16 %v43
    %v131 = vunpack.c.l.b16 %v44
    %v132 = vunpack.c.h.b16 %v44
    %v133 = vunpack.c.l.b16 %v45
    %v134 = vunpack.c.h.b16 %v45
    %v135 = vunpack.c.l.b16 %v46
    %v136 = vunpack.c.h.b16 %v46
    %v137 = vunpack.c.l.b16 %v47
    %v138 = vunpack.c.h.b16 %v47
    %v139 = vunpack.c.l.b16 %v48
    %v140 = vunpack.c.h.b16 %v48
    %v141 = vunpack.c.l.b16 %v49
    %v142 = vunpack.c.h.b16 %v49
    %v143 = vunpack.c.l.b16 %v50
    %v144 = vunpack.c.h.b16 %v50
    %v145 = vunpack.c.l.b16 %v51
    %v146 = vunpack.c.h.b16 %v51
    %v147 = vunpack.c.l.b16 %v52
    %v148 = vunpack.c.h.b16 %v52
    %v149 = vunpack.c.l.b16 %v53
    %v150 = vunpack.c.h.b16 %v53
    %v151 = vunpack.c.l.b16 %v54
    %v152 = vunpack.c.h.b16 %v54
    %v153 = vunpack.c.l.b16 %v55
    %v154 = vunpack.c.h.b16 %v55
    %v155 = vunpack.c.l.b16 %v56
    %v156 = vunpack.c.h.b16 %v56
    %v157 = vunpack.c.l.b16 %v57
    %v158 = vunpack.c.h.b16 %v57
    %v159 = vunpack.c.l.b16 %v58
    %v160 = vunpack.c.h.b16 %v58
    %v161 = vunpack.c.l.b16 %v59
    %v162 = vunpack.c.h.b16 %v59
    %v163 = vunpack.c.l.b16 %v60
    %v164 = vunpack.c.h.b16 %v60
    %v165 = vunpack.c.l.b16 %v61
    %v166 = vunpack.c.h.b16 %v61
    %v167 = vunpack.c.l.b16 %v62
    %v168 = vunpack.c.h.b16 %v62
    %v169 = vunpack.c.l.b16 %v63
    %v170 = vunpack.c.h.b16 %v63
    %v171 = vunpack.c.l.b16 %v64
    %v172 = vunpack.c.h.b16 %v64
    %v173 = vunpack.c.l.b16 %v65
    %v174 = vunpack.c.h.b16 %v65
    %v175 = vunpack.c.l.b16 %v66
    %v176 = vunpack.c.h.b16 %v66
    %v177 = vunpack.c.l.b16 %v67
    %v178 = vunpack.c.h.b16 %v67
    %v179 = vunpack.c.l.b16 %v68
    %v180 = vunpack.c.h.b16 %v68
    %v181 = vunpack.c.l.b16 %v69
    %v182 = vunpack.c.h.b16 %v69
    %v183 = vunpack.c.l.b16 %v70
    %v184 = vunpack.c.h.b16 %v70
    %v185 = vunpack.c.l.b16 %v71
    %v186 = vunpack.c.h.b16 %v71
    %v187 = vunpack.c.l.b16 %v72
    %v188 = vunpack.c.h.b16 %v72
    %v189 = vpack.c.b16 %v129, %v125
    %v190 = vpack.c.b16 %v130, %v126
    %v191 = vpack.c.b16 %v131, %v127
    %v192 = vpack.c.b16 %v132, %v128
    %v193 = vpack.c.b16 %v137, %v133
    %v194 = vpack.c.b16 %v138, %v134
    %v195 = vpack.c.b16 %v139, %v135
    %v196 = vpack.c.b16 %v140, %v136
    %v197 = vpack.c.b16 %v145, %v141
    %v198 = vpack.c.b16 %v146, %v142
    %v199 = vpack.c.b16 %v147, %v143
    %v200 = vpack.c.b16 %v148, %v144
    %v201 = vpack.c.b16 %v153, %v149
    %v202 = vpack.c.b16 %v154, %v150
    %v203 = vpack.c.b16 %v155, %v151
    %v204 = vpack.c.b16 %v156, %v152
    %v205 = vpack.c.b16 %v161, %v157
    %v206 = vpack.c.b16 %v162, %v158
    %v207 = vpack.c.b16 %v163, %v159
    %v208 = vpack.c.b16 %v164, %v160
    %v209 = vpack.c.b16 %v169, %v165
    %v210 = vpack.c.b16 %v170, %v166
    %v211 = vpack.c.b16 %v171, %v167
    %v212 = vpack.c.b16 %v172, %v168
    %v213 = vpack.c.b16 %v177, %v173
    %v214 = vpack.c.b16 %v178, %v174
    %v215 = vpack.c.b16 %v179, %v175
    %v216 = vpack.c.b16 %v180, %v176
    %v217 = vpack.c.b16 %v185, %v181
    %v218 = vpack.c.b16 %v186, %v182
    %v219 = vpack.c.b16 %v187, %v183
    %v220 = vpack.c.b16 %v188, %v184
    %253 = vmatprep.subr.bf16.mxu0 %v190
    %254 = vmatpush1.bf16.xpose.msra.mxu0 %v189
    %255 = vmatprep.subr.bf16.mxu0 %v194
    %256 = vmatpush1.bf16.xpose.msra.mxu0 %v193
    %257 = vmatprep.subr.bf16.mxu0 %v198
    %258 = vmatpush1.bf16.xpose.msra.mxu0 %v197
    %259 = vmatprep.subr.bf16.mxu0 %v202
    %260 = vmatpush1.bf16.xpose.msra.mxu0 %v201
    %261 = vmatprep.subr.bf16.mxu0 %v206
    %262 = vmatpush1.bf16.xpose.msra.mxu0 %v205
    %263 = vmatprep.subr.bf16.mxu0 %v210
    %264 = vmatpush1.bf16.xpose.msra.mxu0 %v209
    %265 = vmatprep.subr.bf16.mxu0 %v214
    %266 = vmatpush1.bf16.xpose.msra.mxu0 %v213
    %267 = vmatprep.subr.bf16.mxu0 %v218
    %268 = vmatpush1.bf16.xpose.msra.mxu0 %v217
    %269 = vmatprep.subr.bf16.mxu0 0
    %270 = vmatpush1.bf16.xpose.msra.mxu0 0
    %271 = vmatprep.subr.bf16.mxu0 0
    %272 = vmatpush1.bf16.xpose.msra.mxu0 0
    %273 = vmatprep.subr.bf16.mxu0 0
    %274 = vmatpush1.bf16.xpose.msra.mxu0 0
    %275 = vmatprep.subr.bf16.mxu0 0
    %276 = vmatpush1.bf16.xpose.msra.mxu0 0
    %277 = vmatprep.subr.bf16.mxu0 0
    %278 = vmatpush1.bf16.xpose.msra.mxu0 0
    %279 = vmatprep.subr.bf16.mxu0 0
    %280 = vmatpush1.bf16.xpose.msra.mxu0 0
    %281 = vmatprep.subr.bf16.mxu0 0
    %282 = vmatpush1.bf16.xpose.msra.mxu0 0
    %283 = vmatprep.subr.bf16.mxu0 0
    %284 = vmatpush1.bf16.xpose.msra.mxu0 0
    %285 = vmatprep.mubr.bf16.mxu0 %v86
    %286 = vmatmul.mubr.bf16.gmra.mrb[0].mxu0 %v85
    %v287 = vpop.f32.mrb[0].mxu0
    %v288 = vadd.f32 0.0, %v287
    %v289 = vpop.f32.mrb[0].mxu0
    %v290 = vpop.f32.mrb[0].mxu0
    %v291 = vadd.f32 0.0, %v290
    %v292 = vpop.f32.mrb[0].mxu0
    %293 = vdwg.mxu0
    %294 = vmatprep.subr.bf16.mxu0 %v192
    %295 = vmatpush1.bf16.xpose.msra.mxu0 %v191
    %296 = vmatprep.subr.bf16.mxu0 %v196
    %297 = vmatpush1.bf16.xpose.msra.mxu0 %v195
    %298 = vmatprep.subr.bf16.mxu0 %v200
    %299 = vmatpush1.bf16.xpose.msra.mxu0 %v199
    %300 = vmatprep.subr.bf16.mxu0 %v204
    %301 = vmatpush1.bf16.xpose.msra.mxu0 %v203
    %302 = vmatprep.subr.bf16.mxu0 %v208
    %303 = vmatpush1.bf16.xpose.msra.mxu0 %v207
    %304 = vmatprep.subr.bf16.mxu0 %v212
    %305 = vmatpush1.bf16.xpose.msra.mxu0 %v211
    %306 = vmatprep.subr.bf16.mxu0 %v216
    %307 = vmatpush1.bf16.xpose.msra.mxu0 %v215
    %308 = vmatprep.subr.bf16.mxu0 %v220
    %309 = vmatpush1.bf16.xpose.msra.mxu0 %v219
    %310 = vmatprep.subr.bf16.mxu0 0
    %311 = vmatpush1.bf16.xpose.msra.mxu0 0
    %312 = vmatprep.subr.bf16.mxu0 0
    %313 = vmatpush1.bf16.xpose.msra.mxu0 0
    %314 = vmatprep.subr.bf16.mxu0 0
    %315 = vmatpush1.bf16.xpose.msra.mxu0 0
    %316 = vmatprep.subr.bf16.mxu0 0
    %317 = vmatpush1.bf16.xpose.msra.mxu0 0
    %318 = vmatprep.subr.bf16.mxu0 0
    %319 = vmatpush1.bf16.xpose.msra.mxu0 0
    %320 = vmatprep.subr.bf16.mxu0 0
    %321 = vmatpush1.bf16.xpose.msra.mxu0 0
    %322 = vmatprep.subr.bf16.mxu0 0
    %323 = vmatpush1.bf16.xpose.msra.mxu0 0
    %324 = vmatprep.subr.bf16.mxu0 0
    %325 = vmatpush1.bf16.xpose.msra.mxu0 0
    %326 = vmatprep.mubr.bf16.mxu0 %v88
    %327 = vmatmul.mubr.bf16.gmra.mrb[0].mxu0 %v87
    %v328 = vpop.f32.mrb[0].mxu0
    %v329 = vadd.f32 %v288, %v328
    %v330 = vpop.f32.mrb[0].mxu0
    %v331 = vpop.f32.mrb[0].mxu0
    %v332 = vadd.f32 %v291, %v331
    %v333 = vpop.f32.mrb[0].mxu0
    %334 = vdwg.mxu0
    %v335 = vadd.f32 %v35, %v329
    %v336 = vadd.f32 %v36, %v332
    %337 = vst [vmem:[%s3] sm:$0xff] %v335
    %338 = vst [vmem:[%s3 + $0x8] sm:$0xff] %v336
    // Predicated region
    $region22: #{_forward.1} parent=1 // pred_check
      %p339 = pneg %p29
    $region23: #{_forward.1} parent=1 // pred_check_branch
      %341 = sbr.rel (%p339) target = $region25
    $region24: #{_forward.1} parent=1 // pred_region
      %v342 = vld [vmem:[%s2] sm:$0x3]
      %v343 = vld [vmem:[%s3] sm:$0xff]
      %v344 = vld [vmem:[%s3 + $0x8] sm:$0xff]
      %v345 = vlaneseq
      %v346 = vshrl.u32 %v345, 7
      %v347 = vsub.s32 0, %v346
      %v348 = vrot.slane %v342, %v347
      %v349 = vmul.f32 %v343, %v348
      %v350 = vmul.f32 %v344, %v348
      %v351 = vlaneseq
      %v352 = vshrl.u32 %v351, 7
      %v353 = vsub.s32 1, %v352
      %v354 = vrot.slane %v342, %v353
      %v355 = vadd.f32 %v349, %v354
      %v356 = vadd.f32 %v350, %v354
      %357 = vst [vmem:[%s3] sm:$0xff] %v355
      %358 = vst [vmem:[%s3 + $0x8] sm:$0xff] %v356
    $region25: #{_forward.1} parent=1 // pred_fallthru
      _
    // Predicated region
    $region26: #{_forward.1} parent=1 // pred_check
      _
    $region27: #{_forward.1} parent=1 // pred_check_branch
      %360 = sbr.rel (0) target = $region29
    $region28: #{_forward.1} parent=1 // pred_region
      _
    $region29: #{_forward.1} parent=1 // pred_fallthru
      _
    // Predicated region
    $region30: #{_forward.1} parent=1 // pred_check
      _
    $region31: #{_forward.1} parent=1 // pred_check_branch
      %362 = sbr.rel (0) target = $region33
    $region32: #{_forward.1} parent=1 // pred_region
      _
    $region33: #{_forward.1} parent=1 // pred_fallthru
      _
    %363 = vsyncpa [#allocation3], 1

</llo_original>
